<compile_context>
chip_gen: v6e
topology: v6e:2x2x1
jax: 0.10.0
libtpu: 0.0.40
codegen_flags: <defaults>
</compile_context>

<pallas_src>
import functools

import jax
import jax.numpy as jnp
from jax.experimental import pallas as pl
from jax.experimental.pallas import tpu as pltpu

HID = 64
BN_EPS = 1e-5
TILE_BATCH = 8192   # rows per grid step (multiple of 8); sweepable


def _round_up(x, m):
    return (x + m - 1) // m * m


def _vmem_budget_bytes():
    # v5e/v6e: 128 MiB physical VMEM; v7x: 64 MiB.  Keep headroom for the
    # compiler's internal scratch and double buffers.
    try:
        cap = int(pltpu.get_tpu_info().vmem_capacity_bytes)
    except Exception:
        cap = 64 << 20
    return int(min(cap * 3 // 4, 96 << 20))


def _hidden(s_ref, a_ref, ws_ref, wa_ref, b1_ref, wfc_ref, bfc_ref):
    """z = relu(s@Ws + a@Wa + b1) @ Wfc + bfc for the current batch tile."""
    h = (jnp.dot(s_ref[...], ws_ref[...], preferred_element_type=jnp.float32)
         + jnp.dot(a_ref[...], wa_ref[...], preferred_element_type=jnp.float32)
         + b1_ref[...])
    h = jnp.maximum(h, 0.0)
    return (jnp.dot(h, wfc_ref[...], preferred_element_type=jnp.float32)
            + bfc_ref[...])


# --------------------- fused single-call kernel (primary) --------------------
def _fused_kernel(s_ref, a_ref, ws_ref, wa_ref, b1_ref, wfc_ref, bfc_ref,
                  gamma_ref, woutt_ref, c0_ref, out_ref,
                  z_scr, sum_scr, sq_scr, whead_scr, d_scr,
                  *, tb, batch, n_tiles, need_mask):
    phase = pl.program_id(0)
    i = pl.program_id(1)

    # ---- phase 0: compute z per tile, keep resident, accumulate BN stats ----
    @pl.when(phase == 0)
    def _():
        @pl.when(i == 0)
        def _():
            sum_scr[...] = jnp.zeros_like(sum_scr)
            sq_scr[...] = jnp.zeros_like(sq_scr)

        z = _hidden(s_ref, a_ref, ws_ref, wa_ref, b1_ref, wfc_ref, bfc_ref)
        z_scr[i] = z

        if need_mask:
            # Padded rows only exist in the last tile; every other step stays
            # on the cheap unmasked accumulation path.
            @pl.when(i == n_tiles - 1)
            def _():
                rows = i * tb + jax.lax.broadcasted_iota(jnp.int32, z.shape, 0)
                zm = jnp.where(rows < batch, z, 0.0)
                sum_scr[...] += jnp.sum(zm, axis=0, keepdims=True)
                sq_scr[...] += jnp.sum(zm * zm, axis=0, keepdims=True)

            @pl.when(i < n_tiles - 1)
            def _():
                sum_scr[...] += jnp.sum(z, axis=0, keepdims=True)
                sq_scr[...] += jnp.sum(z * z, axis=0, keepdims=True)
        else:
            sum_scr[...] += jnp.sum(z, axis=0, keepdims=True)
            sq_scr[...] += jnp.sum(z * z, axis=0, keepdims=True)

    # ---- phase boundary: fold BN affine + output head into (1,64) & (1,1) ---
    @pl.when(jnp.logical_and(phase == 1, i == 0))
    def _():
        inv_b = jnp.float32(1.0 / batch)
        mean = sum_scr[...] * inv_b                               # (1, 64)
        var = jnp.maximum(sq_scr[...] * inv_b - mean * mean, 0.0)  # clamp >= 0
        inv_std = jax.lax.rsqrt(var + BN_EPS)
        whead = gamma_ref[...] * inv_std * woutt_ref[...]         # (1, 64)
        whead_scr[...] = whead
        d_scr[...] = c0_ref[...] - jnp.sum(mean * whead, axis=1, keepdims=True)

    # ---- phase 1: folded BN + output head, lane-dense (1, TB) output row ----
    @pl.when(phase == 1)
    def _():
        z = z_scr[i]                                              # (tb, 64)
        row = jax.lax.dot_general(whead_scr[...], z,
                                  (((1,), (1,)), ((), ())),
                                  preferred_element_type=jnp.float32)  # (1, tb)
        out_ref[...] = jnp.reshape(row + d_scr[...], out_ref.shape)


# ------------------ two-pass recompute kernels (large-B fallback) ------------
def _stats_kernel(s_ref, a_ref, ws_ref, wa_ref, b1_ref, wfc_ref, bfc_ref,
                  sum_ref, sq_ref, *, tb, batch, need_mask):
    i = pl.program_id(0)

    @pl.when(i == 0)
    def _():
        sum_ref[...] = jnp.zeros_like(sum_ref)
        sq_ref[...] = jnp.zeros_like(sq_ref)

    z = _hidden(s_ref, a_ref, ws_ref, wa_ref, b1_ref, wfc_ref, bfc_ref)

    if need_mask:
        last = pl.num_programs(0) - 1

        @pl.when(i == last)
        def _():
            rows = i * tb + jax.lax.broadcasted_iota(jnp.int32, z.shape, 0)
            zm = jnp.where(rows < batch, z, 0.0)
            sum_ref[...] += jnp.sum(zm, axis=0, keepdims=True)
            sq_ref[...] += jnp.sum(zm * zm, axis=0, keepdims=True)

        @pl.when(i < last)
        def _():
            sum_ref[...] += jnp.sum(z, axis=0, keepdims=True)
            sq_ref[...] += jnp.sum(z * z, axis=0, keepdims=True)
    else:
        sum_ref[...] += jnp.sum(z, axis=0, keepdims=True)
        sq_ref[...] += jnp.sum(z * z, axis=0, keepdims=True)


def _out_kernel(s_ref, a_ref, ws_ref, wa_ref, b1_ref, wfc_ref, bfc_ref,
                whead_ref, d_ref, out_ref):
    z = _hidden(s_ref, a_ref, ws_ref, wa_ref, b1_ref, wfc_ref, bfc_ref)
    row = jax.lax.dot_general(whead_ref[...], z, (((1,), (1,)), ((), ())),
                              preferred_element_type=jnp.float32)
    out_ref[...] = jnp.reshape(row + d_ref[...], out_ref.shape)


# ----------------------------- parameters ------------------------------------
def init_cnet_params(key, s_dim, a_dim):
    """Deterministic synthetic parameters matching CNet.__init__ shapes.
    Weights ~ N(0, 0.1); biases ~ U(-1/sqrt(fan_in), 1/sqrt(fan_in)).
    Weights stored pre-transposed as [in_features, out_features]."""
    ks = jax.random.split(key, 8)

    def lin(kw, kb, fan_in, fan_out):
        w = 0.1 * jax.random.normal(kw, (fan_in, fan_out), dtype=jnp.float32)
        bound = 1.0 / jnp.sqrt(float(fan_in))
        b = jax.random.uniform(kb, (1, fan_out), minval=-bound, maxval=bound,
                               dtype=jnp.float32)
        return w, b

    ws, bs = lin(ks[0], ks[1], s_dim, HID)
    wa, ba = lin(ks[2], ks[3], a_dim, HID)
    wfc, bfc = lin(ks[4], ks[5], HID, HID)
    wout, bout = lin(ks[6], ks[7], HID, 1)
    gamma = jnp.ones((1, HID), dtype=jnp.float32)
    beta = jnp.zeros((1, HID), dtype=jnp.float32)
    return dict(ws=ws, bs=bs, wa=wa, ba=ba, wfc=wfc, bfc=bfc,
                gamma=gamma, beta=beta, wout=wout, bout=bout)


# ------------------------------- forward -------------------------------------
def cnet_forward(s, a, params, *, tile_batch=TILE_BATCH, force_two_pass=False):
    B, s_dim = s.shape
    a_dim = a.shape[1]

    ws, wa = params["ws"], params["wa"]
    b1 = params["bs"] + params["ba"]                   # fused first-layer bias
    wfc, bfc = params["wfc"], params["bfc"]
    gamma = params["gamma"]
    wout_t = params["wout"].T                          # (1, 64)
    # Batch-independent part of the folded head offset: bout + beta . wout.
    c0 = jnp.reshape(params["bout"][0, 0] + jnp.sum(params["beta"] * wout_t),
                     (1, 1)).astype(jnp.float32)

    tile_batch = max(8, _round_up(int(tile_batch), 8))
    tb = min(tile_batch, _round_up(B, 8))
    b_pad = _round_up(B, tb)
    n_tiles = b_pad // tb
    need_mask = b_pad != B

    if b_pad != B:
        s = jnp.pad(s, ((0, b_pad - B), (0, 0)))
        a = jnp.pad(a, ((0, b_pad - B), (0, 0)))

    def full(shape):
        return pl.BlockSpec(shape, lambda *idx: (0,) * len(shape))

    weight_specs = [full((s_dim, HID)), full((a_dim, HID)), full((1, HID)),
                    full((HID, HID)), full((1, HID))]

    param_bytes = 4 * ((s_dim + a_dim) * HID + HID * HID + 4 * HID + 1)
    act_bytes = 4 * b_pad * (s_dim + a_dim)
    flops_body = 2 * b_pad * ((s_dim + a_dim) * HID + HID * HID)

    vmem_budget = _vmem_budget_bytes()

    # VMEM needed by the fused (single HBM read) path.
    fused_vmem = (b_pad * HID * 4                       # resident z scratch
                  + 2 * 2 * tb * (s_dim + a_dim) * 4    # dbl-buffered s/a tiles
                  + 2 * tb * 4                          # dbl-buffered out rows
                  + 3 * tb * HID * 4                    # h / z temporaries
                  + param_bytes + (5 * HID + 16) * 4)
    use_fused = (not force_two_pass) and int(fused_vmem * 1.25) <= vmem_budget

    if use_fused:
        # Single kernel, two-phase grid.  Inputs are fetched once (index maps
        # keep the last block resident during phase 1); outputs are written
        # once during phase 1 (index map stays on block 0 during phase 0).
        out_rows = pl.pallas_call(
            functools.partial(_fused_kernel, tb=tb, batch=B,
                              n_tiles=n_tiles, need_mask=need_mask),
            grid=(2, n_tiles),
            in_specs=[pl.BlockSpec(
                          (tb, s_dim),
                          lambda p, i: ((1 - p) * i + p * (n_tiles - 1), 0)),
                      pl.BlockSpec(
                          (tb, a_dim),
                          lambda p, i: ((1 - p) * i + p * (n_tiles - 1), 0)),
                      *weight_specs,
                      full((1, HID)),     # gamma
                      full((1, HID)),     # wout^T
                      full((1, 1))],      # c0
            out_specs=pl.BlockSpec((1, 1, tb), lambda p, i: (p * i, 0, 0)),
            out_shape=jax.ShapeDtypeStruct((n_tiles, 1, tb), jnp.float32),
            scratch_shapes=[pltpu.VMEM((n_tiles, tb, HID), jnp.float32),  # z
                            pltpu.VMEM((1, HID), jnp.float32),            # sum
                            pltpu.VMEM((1, HID), jnp.float32),            # sumsq
                            pltpu.VMEM((1, HID), jnp.float32),            # whead
                            pltpu.VMEM((1, 1), jnp.float32)],             # d
            compiler_params=pltpu.CompilerParams(
                dimension_semantics=("arbitrary", "arbitrary"),
                vmem_limit_bytes=vmem_budget),
            cost_estimate=pl.CostEstimate(
                flops=flops_body + 2 * b_pad * HID, transcendentals=0,
                bytes_accessed=act_bytes + param_bytes + 4 * b_pad),
        )(s, a, ws, wa, b1, wfc, bfc, gamma, wout_t, c0)
        return out_rows.reshape(b_pad, 1)[:B]

    # ---------------- fallback: two-pass recompute (very large B) ------------
    s_sum, s_sq = pl.pallas_call(
        functools.partial(_stats_kernel, tb=tb, batch=B, need_mask=need_mask),
        grid=(n_tiles,),
        in_specs=[pl.BlockSpec((tb, s_dim), lambda i: (i, 0)),
                  pl.BlockSpec((tb, a_dim), lambda i: (i, 0)),
                  *weight_specs],
        out_specs=(pl.BlockSpec((1, HID), lambda i: (0, 0)),
                   pl.BlockSpec((1, HID), lambda i: (0, 0))),
        out_shape=(jax.ShapeDtypeStruct((1, HID), jnp.float32),
                   jax.ShapeDtypeStruct((1, HID), jnp.float32)),
        compiler_params=pltpu.CompilerParams(
            dimension_semantics=("arbitrary",),
            vmem_limit_bytes=vmem_budget),
        cost_estimate=pl.CostEstimate(
            flops=flops_body, transcendentals=0,
            bytes_accessed=act_bytes + param_bytes + 2 * 4 * HID),
    )(s, a, ws, wa, b1, wfc, bfc)

    mean = s_sum / B
    var = jnp.maximum(s_sq / B - mean * mean, 0.0)
    inv_std = jax.lax.rsqrt(var + BN_EPS)
    whead = gamma * inv_std * wout_t                                  # (1, 64)
    d = (c0 - jnp.sum(mean * whead, axis=1, keepdims=True)).astype(jnp.float32)

    out_rows = pl.pallas_call(
        _out_kernel,
        grid=(n_tiles,),
        in_specs=[pl.BlockSpec((tb, s_dim), lambda i: (i, 0)),
                  pl.BlockSpec((tb, a_dim), lambda i: (i, 0)),
                  *weight_specs,
                  full((1, HID)),     # whead
                  full((1, 1))],      # d
        out_specs=pl.BlockSpec((1, 1, tb), lambda i: (i, 0, 0)),
        out_shape=jax.ShapeDtypeStruct((n_tiles, 1, tb), jnp.float32),
        compiler_params=pltpu.CompilerParams(
            dimension_semantics=("parallel",),
            vmem_limit_bytes=vmem_budget),
        cost_estimate=pl.CostEstimate(
            flops=flops_body + 2 * b_pad * HID, transcendentals=0,
            bytes_accessed=act_bytes + param_bytes + 4 * b_pad),
    )(s, a, ws, wa, b1, wfc, bfc, whead, d)

    return out_rows.reshape(b_pad, 1)[:B]


# ------------------------------ reference ------------------------------------
def cnet_reference(s, a, p):
    x = s @ p["ws"] + p["bs"]
    y = a @ p["wa"] + p["ba"]
    net = jnp.maximum(x + y, 0.0)
    net = net @ p["wfc"] + p["bfc"]
    mean = jnp.mean(net, axis=0, keepdims=True)
    var = jnp.mean((net - mean) ** 2, axis=0, keepdims=True)
    net = p["gamma"] * (net - mean) / jnp.sqrt(var + BN_EPS) + p["beta"]
    return net @ p["wout"] + p["bout"]


if __name__ == "__main__":
    key = jax.random.PRNGKey(0)
    k_params, k_s, k_a, k_s2, k_a2 = jax.random.split(key, 5)

    # Small primary case (single tile, no padding) — fused path.
    B, S_DIM, A_DIM = 8, 16, 8
    params = init_cnet_params(k_params, S_DIM, A_DIM)
    s = jax.random.normal(k_s, (B, S_DIM), dtype=jnp.float32)
    a = jax.random.normal(k_a, (B, A_DIM), dtype=jnp.float32)

    out = cnet_forward(s, a, params)
    jax.block_until_ready(out)
    ref = cnet_reference(s, a, params)
    assert out.shape == (B, 1)
    assert jnp.allclose(out, ref, atol=2e-4, rtol=2e-4)

    # Multi-tile fused path: two-phase grid, padding mask on last tile only.
    B2 = 300
    s2 = jax.random.normal(k_s2, (B2, S_DIM), dtype=jnp.float32)
    a2 = jax.random.normal(k_a2, (B2, A_DIM), dtype=jnp.float32)
    out2 = cnet_forward(s2, a2, params, tile_batch=128)
    jax.block_until_ready(out2)
    ref2 = cnet_reference(s2, a2, params)
    assert out2.shape == (B2, 1)
    assert jnp.allclose(out2, ref2, atol=5e-4, rtol=5e-4)

    # Exercise the large-B two-pass fallback path as well.
    out3 = cnet_forward(s2, a2, params, tile_batch=128, force_two_pass=True)
    jax.block_until_ready(out3)
    assert out3.shape == (B2, 1)
    assert jnp.allclose(out3, ref2, atol=5e-4, rtol=5e-4)

    print("KERNEL_OK")
</pallas_src>

<mosaic_0001>
module attributes {stable_mosaic.version = 11 : i64} {
  func.func @_fused_kernel(%arg0: i32, %arg1: i32, %arg2: memref<8x16xf32, #tpu.memory_space<vmem>>, %arg3: memref<8x8xf32, #tpu.memory_space<vmem>>, %arg4: memref<16x64xf32, #tpu.memory_space<vmem>>, %arg5: memref<8x64xf32, #tpu.memory_space<vmem>>, %arg6: memref<1x64xf32, #tpu.memory_space<vmem>>, %arg7: memref<64x64xf32, #tpu.memory_space<vmem>>, %arg8: memref<1x64xf32, #tpu.memory_space<vmem>>, %arg9: memref<1x64xf32, #tpu.memory_space<vmem>>, %arg10: memref<1x64xf32, #tpu.memory_space<vmem>>, %arg11: memref<1x1xf32, #tpu.memory_space<vmem>>, %arg12: memref<1x1x8xf32, #tpu.memory_space<vmem>>, %arg13: memref<1x8x64xf32, #tpu.memory_space<vmem>>, %arg14: memref<1x64xf32, #tpu.memory_space<vmem>>, %arg15: memref<1x64xf32, #tpu.memory_space<vmem>>, %arg16: memref<1x64xf32, #tpu.memory_space<vmem>>, %arg17: memref<1x1xf32, #tpu.memory_space<vmem>>) attributes {dimension_semantics = [#tpu.dimension_semantics<arbitrary>, #tpu.dimension_semantics<arbitrary>], iteration_bounds = array<i64: 2, 1>, scalar_prefetch = 0 : i64, scratch_operands = 5 : i64, tpu.core_type = #tpu.core_type<tc>, window_params = [{transform_indices = @transform_0, window_bounds = array<i64: 8, 16>}, {transform_indices = @transform_1, window_bounds = array<i64: 8, 8>}, {pipeline_mode = #tpu.pipeline_mode<synchronous>, transform_indices = @transform_2, window_bounds = array<i64: 16, 64>}, {pipeline_mode = #tpu.pipeline_mode<synchronous>, transform_indices = @transform_3, window_bounds = array<i64: 8, 64>}, {pipeline_mode = #tpu.pipeline_mode<synchronous>, transform_indices = @transform_4, window_bounds = array<i64: 1, 64>}, {pipeline_mode = #tpu.pipeline_mode<synchronous>, transform_indices = @transform_5, window_bounds = array<i64: 64, 64>}, {pipeline_mode = #tpu.pipeline_mode<synchronous>, transform_indices = @transform_6, window_bounds = array<i64: 1, 64>}, {pipeline_mode = #tpu.pipeline_mode<synchronous>, transform_indices = @transform_7, window_bounds = array<i64: 1, 64>}, {pipeline_mode = #tpu.pipeline_mode<synchronous>, transform_indices = @transform_8, window_bounds = array<i64: 1, 64>}, {pipeline_mode = #tpu.pipeline_mode<synchronous>, transform_indices = @transform_9, window_bounds = array<i64: 1, 1>}, {transform_indices = @transform_10, window_bounds = array<i64: 1, 1, 8>}]} {
    %c0_i32 = arith.constant 0 : i32
    %0 = arith.cmpi eq, %arg0, %c0_i32 : i32
    %1 = arith.extui %0 : i1 to i32
    %c0_i32_0 = arith.constant 0 : i32
    %2 = arith.cmpi ne, %1, %c0_i32_0 : i32
    scf.if %2 {
      %c0_i32_5 = arith.constant 0 : i32
      %11 = arith.cmpi eq, %arg1, %c0_i32_5 : i32
      %12 = arith.extui %11 : i1 to i32
      %c0_i32_6 = arith.constant 0 : i32
      %13 = arith.cmpi ne, %12, %c0_i32_6 : i32
      scf.if %13 {
        %cst_35 = arith.constant 0.000000e+00 : f32
        %46 = vector.broadcast %cst_35 : f32 to vector<1x64xf32>
        %c0_36 = arith.constant 0 : index
        %c0_37 = arith.constant 0 : index
        %47 = vector.load %arg14[%c0_36, %c0_37] : memref<1x64xf32, #tpu.memory_space<vmem>>, vector<1x64xf32>
        tpu.vector_store %arg14[%c0_36, %c0_37], %46 {strides = array<i32>} : memref<1x64xf32, #tpu.memory_space<vmem>>, vector<1x64xf32>,
        %cst_38 = arith.constant 0.000000e+00 : f32
        %48 = vector.broadcast %cst_38 : f32 to vector<1x64xf32>
        %c0_39 = arith.constant 0 : index
        %c0_40 = arith.constant 0 : index
        %49 = vector.load %arg15[%c0_39, %c0_40] : memref<1x64xf32, #tpu.memory_space<vmem>>, vector<1x64xf32>
        tpu.vector_store %arg15[%c0_39, %c0_40], %48 {strides = array<i32>} : memref<1x64xf32, #tpu.memory_space<vmem>>, vector<1x64xf32>,
      } else {
      }
      %c0 = arith.constant 0 : index
      %c0_7 = arith.constant 0 : index
      %14 = vector.load %arg2[%c0, %c0_7] : memref<8x16xf32, #tpu.memory_space<vmem>>, vector<8x16xf32>
      %c0_8 = arith.constant 0 : index
      %c0_9 = arith.constant 0 : index
      %15 = vector.load %arg4[%c0_8, %c0_9] : memref<16x64xf32, #tpu.memory_space<vmem>>, vector<16x64xf32>
      %cst = arith.constant dense<0.000000e+00> : vector<8x64xf32>
      %16 = tpu.matmul %14, %15, %cst {dimension_numbers = #tpu.dot_dimension_numbers<[1], [0], [0], [1], [0, 0, 1, 1], [], []>} : vector<8x16xf32>, vector<16x64xf32>, vector<8x64xf32> -> vector<8x64xf32>
      %c0_10 = arith.constant 0 : index
      %c0_11 = arith.constant 0 : index
      %17 = vector.load %arg3[%c0_10, %c0_11] : memref<8x8xf32, #tpu.memory_space<vmem>>, vector<8x8xf32>
      %c0_12 = arith.constant 0 : index
      %c0_13 = arith.constant 0 : index
      %18 = vector.load %arg5[%c0_12, %c0_13] : memref<8x64xf32, #tpu.memory_space<vmem>>, vector<8x64xf32>
      %cst_14 = arith.constant dense<0.000000e+00> : vector<8x64xf32>
      %19 = tpu.matmul %17, %18, %cst_14 {dimension_numbers = #tpu.dot_dimension_numbers<[1], [0], [0], [1], [0, 0, 1, 1], [], []>} : vector<8x8xf32>, vector<8x64xf32>, vector<8x64xf32> -> vector<8x64xf32>
      %20 = arith.addf %16, %19 : vector<8x64xf32>
      %c0_15 = arith.constant 0 : index
      %c0_16 = arith.constant 0 : index
      %21 = vector.load %arg6[%c0_15, %c0_16] : memref<1x64xf32, #tpu.memory_space<vmem>>, vector<1x64xf32>
      %22 = vector.broadcast %21 : vector<1x64xf32> to vector<8x64xf32>
      %23 = arith.addf %20, %22 : vector<8x64xf32>
      %cst_17 = arith.constant 0.000000e+00 : f32
      %24 = vector.broadcast %cst_17 : f32 to vector<8x64xf32>
      %25 = arith.maximumf %23, %24 : vector<8x64xf32>
      %c0_18 = arith.constant 0 : index
      %c0_19 = arith.constant 0 : index
      %26 = vector.load %arg7[%c0_18, %c0_19] : memref<64x64xf32, #tpu.memory_space<vmem>>, vector<64x64xf32>
      %cst_20 = arith.constant dense<0.000000e+00> : vector<8x64xf32>
      %27 = tpu.matmul %25, %26, %cst_20 {dimension_numbers = #tpu.dot_dimension_numbers<[1], [0], [0], [1], [0, 0, 1, 1], [], []>} : vector<8x64xf32>, vector<64x64xf32>, vector<8x64xf32> -> vector<8x64xf32>
      %c0_21 = arith.constant 0 : index
      %c0_22 = arith.constant 0 : index
      %28 = vector.load %arg8[%c0_21, %c0_22] : memref<1x64xf32, #tpu.memory_space<vmem>>, vector<1x64xf32>
      %29 = vector.broadcast %28 : vector<1x64xf32> to vector<8x64xf32>
      %30 = arith.addf %27, %29 : vector<8x64xf32>
      %31 = arith.index_cast %arg1 : i32 to index
      %c0_23 = arith.constant 0 : index
      %c0_24 = arith.constant 0 : index
      %32 = vector.load %arg13[%31, %c0_23, %c0_24] : memref<1x8x64xf32, #tpu.memory_space<vmem>>, vector<1x8x64xf32>
      %33 = vector.shape_cast %32 : vector<1x8x64xf32> to vector<8x64xf32>
      %34 = vector.shape_cast %30 : vector<8x64xf32> to vector<1x8x64xf32>
      tpu.vector_store %arg13[%31, %c0_23, %c0_24], %34 {strides = array<i32>} : memref<1x8x64xf32, #tpu.memory_space<vmem>>, vector<1x8x64xf32>,
      %c0_25 = arith.constant 0 : index
      %c0_26 = arith.constant 0 : index
      %35 = vector.load %arg14[%c0_25, %c0_26] : memref<1x64xf32, #tpu.memory_space<vmem>>, vector<1x64xf32>
      %cst_27 = arith.constant dense<0.000000e+00> : vector<64xf32>
      %36 = vector.multi_reduction <add>, %30, %cst_27 [0] : vector<8x64xf32> to vector<64xf32>
      %37 = vector.shape_cast %36 : vector<64xf32> to vector<1x64xf32>
      %38 = arith.addf %35, %37 : vector<1x64xf32>
      %c0_28 = arith.constant 0 : index
      %c0_29 = arith.constant 0 : index
      %39 = vector.load %arg14[%c0_28, %c0_29] : memref<1x64xf32, #tpu.memory_space<vmem>>, vector<1x64xf32>
      tpu.vector_store %arg14[%c0_28, %c0_29], %38 {strides = array<i32>} : memref<1x64xf32, #tpu.memory_space<vmem>>, vector<1x64xf32>,
      %c0_30 = arith.constant 0 : index
      %c0_31 = arith.constant 0 : index
      %40 = vector.load %arg15[%c0_30, %c0_31] : memref<1x64xf32, #tpu.memory_space<vmem>>, vector<1x64xf32>
      %41 = arith.mulf %30, %30 : vector<8x64xf32>
      %cst_32 = arith.constant dense<0.000000e+00> : vector<64xf32>
      %42 = vector.multi_reduction <add>, %41, %cst_32 [0] : vector<8x64xf32> to vector<64xf32>
      %43 = vector.shape_cast %42 : vector<64xf32> to vector<1x64xf32>
      %44 = arith.addf %40, %43 : vector<1x64xf32>
      %c0_33 = arith.constant 0 : index
      %c0_34 = arith.constant 0 : index
      %45 = vector.load %arg15[%c0_33, %c0_34] : memref<1x64xf32, #tpu.memory_space<vmem>>, vector<1x64xf32>
      tpu.vector_store %arg15[%c0_33, %c0_34], %44 {strides = array<i32>} : memref<1x64xf32, #tpu.memory_space<vmem>>, vector<1x64xf32>,
    } else {
    }
    %c1_i32 = arith.constant 1 : i32
    %3 = arith.cmpi eq, %arg0, %c1_i32 : i32
    %c0_i32_1 = arith.constant 0 : i32
    %4 = arith.cmpi eq, %arg1, %c0_i32_1 : i32
    %5 = arith.andi %3, %4 : i1
    %6 = arith.extui %5 : i1 to i32
    %c0_i32_2 = arith.constant 0 : i32
    %7 = arith.cmpi ne, %6, %c0_i32_2 : i32
    scf.if %7 {
      %c0 = arith.constant 0 : index
      %c0_5 = arith.constant 0 : index
      %11 = vector.load %arg14[%c0, %c0_5] : memref<1x64xf32, #tpu.memory_space<vmem>>, vector<1x64xf32>
      %cst = arith.constant 1.250000e-01 : f32
      %12 = vector.broadcast %cst : f32 to vector<1x64xf32>
      %13 = arith.mulf %11, %12 : vector<1x64xf32>
      %c0_6 = arith.constant 0 : index
      %c0_7 = arith.constant 0 : index
      %14 = vector.load %arg15[%c0_6, %c0_7] : memref<1x64xf32, #tpu.memory_space<vmem>>, vector<1x64xf32>
      %cst_8 = arith.constant 1.250000e-01 : f32
      %15 = vector.broadcast %cst_8 : f32 to vector<1x64xf32>
      %16 = arith.mulf %14, %15 : vector<1x64xf32>
      %17 = arith.mulf %13, %13 : vector<1x64xf32>
      %18 = arith.subf %16, %17 : vector<1x64xf32>
      %cst_9 = arith.constant 0.000000e+00 : f32
      %19 = vector.broadcast %cst_9 : f32 to vector<1x64xf32>
      %20 = arith.maximumf %18, %19 : vector<1x64xf32>
      %cst_10 = arith.constant 9.99999974E-6 : f32
      %21 = vector.broadcast %cst_10 : f32 to vector<1x64xf32>
      %22 = arith.addf %20, %21 : vector<1x64xf32>
      %23 = math.rsqrt %22 : vector<1x64xf32>
      %c0_11 = arith.constant 0 : index
      %c0_12 = arith.constant 0 : index
      %24 = vector.load %arg9[%c0_11, %c0_12] : memref<1x64xf32, #tpu.memory_space<vmem>>, vector<1x64xf32>
      %25 = arith.mulf %24, %23 : vector<1x64xf32>
      %c0_13 = arith.constant 0 : index
      %c0_14 = arith.constant 0 : index
      %26 = vector.load %arg10[%c0_13, %c0_14] : memref<1x64xf32, #tpu.memory_space<vmem>>, vector<1x64xf32>
      %27 = arith.mulf %25, %26 : vector<1x64xf32>
      %c0_15 = arith.constant 0 : index
      %c0_16 = arith.constant 0 : index
      %28 = vector.load %arg16[%c0_15, %c0_16] : memref<1x64xf32, #tpu.memory_space<vmem>>, vector<1x64xf32>
      tpu.vector_store %arg16[%c0_15, %c0_16], %27 {strides = array<i32>} : memref<1x64xf32, #tpu.memory_space<vmem>>, vector<1x64xf32>,
      %c0_17 = arith.constant 0 : index
      %c0_18 = arith.constant 0 : index
      %29 = vector.load %arg11[%c0_17, %c0_18] : memref<1x1xf32, #tpu.memory_space<vmem>>, vector<1x1xf32>
      %30 = arith.mulf %13, %27 : vector<1x64xf32>
      %cst_19 = arith.constant dense<0.000000e+00> : vector<1xf32>
      %31 = vector.multi_reduction <add>, %30, %cst_19 [1] : vector<1x64xf32> to vector<1xf32>
      %32 = vector.shape_cast %31 : vector<1xf32> to vector<1x1xf32>
      %33 = arith.subf %29, %32 : vector<1x1xf32>
      %c0_20 = arith.constant 0 : index
      %c0_21 = arith.constant 0 : index
      %34 = vector.load %arg17[%c0_20, %c0_21] : memref<1x1xf32, #tpu.memory_space<vmem>>, vector<1x1xf32>
      tpu.vector_store %arg17[%c0_20, %c0_21], %33 {strides = array<i32>} : memref<1x1xf32, #tpu.memory_space<vmem>>, vector<1x1xf32>,
    } else {
    }
    %c1_i32_3 = arith.constant 1 : i32
    %8 = arith.cmpi eq, %arg0, %c1_i32_3 : i32
    %9 = arith.extui %8 : i1 to i32
    %c0_i32_4 = arith.constant 0 : i32
    %10 = arith.cmpi ne, %9, %c0_i32_4 : i32
    scf.if %10 {
      %11 = arith.index_cast %arg1 : i32 to index
      %c0 = arith.constant 0 : index
      %c0_5 = arith.constant 0 : index
      %12 = vector.load %arg13[%11, %c0, %c0_5] : memref<1x8x64xf32, #tpu.memory_space<vmem>>, vector<1x8x64xf32>
      %13 = vector.shape_cast %12 : vector<1x8x64xf32> to vector<8x64xf32>
      %c0_6 = arith.constant 0 : index
      %c0_7 = arith.constant 0 : index
      %14 = vector.load %arg16[%c0_6, %c0_7] : memref<1x64xf32, #tpu.memory_space<vmem>>, vector<1x64xf32>
      %cst = arith.constant dense<0.000000e+00> : vector<1x8xf32>
      %15 = tpu.matmul %14, %13, %cst {dimension_numbers = #tpu.dot_dimension_numbers<[1], [1], [0], [0], [0, 0, 1, 0], [], []>} : vector<1x64xf32>, vector<8x64xf32>, vector<1x8xf32> -> vector<1x8xf32>
      %c0_8 = arith.constant 0 : index
      %c0_9 = arith.constant 0 : index
      %16 = vector.load %arg17[%c0_8, %c0_9] : memref<1x1xf32, #tpu.memory_space<vmem>>, vector<1x1xf32>
      %17 = vector.broadcast %16 : vector<1x1xf32> to vector<1x8xf32>
      %18 = arith.addf %15, %17 : vector<1x8xf32>
      %19 = vector.shape_cast %18 : vector<1x8xf32> to vector<1x1x8xf32>
      %c0_10 = arith.constant 0 : index
      %c0_11 = arith.constant 0 : index
      %c0_12 = arith.constant 0 : index
      %20 = vector.load %arg12[%c0_10, %c0_11, %c0_12] : memref<1x1x8xf32, #tpu.memory_space<vmem>>, vector<1x1x8xf32>
      tpu.vector_store %arg12[%c0_10, %c0_11, %c0_12], %19 {strides = array<i32>} : memref<1x1x8xf32, #tpu.memory_space<vmem>>, vector<1x1x8xf32>,
    } else {
    }
    return
  }
  func.func @transform_0(%arg0: i32, %arg1: i32) -> (i32, i32) {
    %c1_i32 = arith.constant 1 : i32
    %0 = arith.subi %c1_i32, %arg0 : i32
    %1 = arith.muli %0, %arg1 : i32
    %c0_i32 = arith.constant 0 : i32
    %2 = arith.muli %arg0, %c0_i32 : i32
    %3 = arith.addi %1, %2 : i32
    %c0_i32_0 = arith.constant 0 : i32
    %c0_i32_1 = arith.constant 0 : i32
    return %3, %c0_i32_0 : i32, i32
  }
  func.func @transform_1(%arg0: i32, %arg1: i32) -> (i32, i32) {
    %c1_i32 = arith.constant 1 : i32
    %0 = arith.subi %c1_i32, %arg0 : i32
    %1 = arith.muli %0, %arg1 : i32
    %c0_i32 = arith.constant 0 : i32
    %2 = arith.muli %arg0, %c0_i32 : i32
    %3 = arith.addi %1, %2 : i32
    %c0_i32_0 = arith.constant 0 : i32
    %c0_i32_1 = arith.constant 0 : i32
    return %3, %c0_i32_0 : i32, i32
  }
  func.func @transform_2(%arg0: i32, %arg1: i32) -> (i32, i32) {
    %c0_i32 = arith.constant 0 : i32
    %c0_i32_0 = arith.constant 0 : i32
    %c0_i32_1 = arith.constant 0 : i32
    return %c0_i32, %c0_i32_0 : i32, i32
  }
  func.func @transform_3(%arg0: i32, %arg1: i32) -> (i32, i32) {
    %c0_i32 = arith.constant 0 : i32
    %c0_i32_0 = arith.constant 0 : i32
    %c0_i32_1 = arith.constant 0 : i32
    return %c0_i32, %c0_i32_0 : i32, i32
  }
  func.func @transform_4(%arg0: i32, %arg1: i32) -> (i32, i32) {
    %c0_i32 = arith.constant 0 : i32
    %c0_i32_0 = arith.constant 0 : i32
    %c0_i32_1 = arith.constant 0 : i32
    return %c0_i32, %c0_i32_0 : i32, i32
  }
  func.func @transform_5(%arg0: i32, %arg1: i32) -> (i32, i32) {
    %c0_i32 = arith.constant 0 : i32
    %c0_i32_0 = arith.constant 0 : i32
    %c0_i32_1 = arith.constant 0 : i32
    return %c0_i32, %c0_i32_0 : i32, i32
  }
  func.func @transform_6(%arg0: i32, %arg1: i32) -> (i32, i32) {
    %c0_i32 = arith.constant 0 : i32
    %c0_i32_0 = arith.constant 0 : i32
    %c0_i32_1 = arith.constant 0 : i32
    return %c0_i32, %c0_i32_0 : i32, i32
  }
  func.func @transform_7(%arg0: i32, %arg1: i32) -> (i32, i32) {
    %c0_i32 = arith.constant 0 : i32
    %c0_i32_0 = arith.constant 0 : i32
    %c0_i32_1 = arith.constant 0 : i32
    return %c0_i32, %c0_i32_0 : i32, i32
  }
  func.func @transform_8(%arg0: i32, %arg1: i32) -> (i32, i32) {
    %c0_i32 = arith.constant 0 : i32
    %c0_i32_0 = arith.constant 0 : i32
    %c0_i32_1 = arith.constant 0 : i32
    return %c0_i32, %c0_i32_0 : i32, i32
  }
  func.func @transform_9(%arg0: i32, %arg1: i32) -> (i32, i32) {
    %c0_i32 = arith.constant 0 : i32
    %c0_i32_0 = arith.constant 0 : i32
    %c0_i32_1 = arith.constant 0 : i32
    return %c0_i32, %c0_i32_0 : i32, i32
  }
  func.func @transform_10(%arg0: i32, %arg1: i32) -> (i32, i32, i32) {
    %0 = arith.muli %arg0, %arg1 : i32
    %c0_i32 = arith.constant 0 : i32
    %c0_i32_0 = arith.constant 0 : i32
    %c0_i32_1 = arith.constant 0 : i32
    return %0, %c0_i32, %c0_i32_0 : i32, i32, i32
  }
}

</mosaic_0001>

<llo_original>
// kernel: tpu_custom_call.1
$region0: #{tpu_custom_call.1}
  #allocation0 [shape = 'u32[]', space=smem, size = 0x4, offset = 0x4, fixed_abs, tag = 'smem constant byte address 0x4 - core index']
  #allocation1 [shape = 'u32[144,128]{1,0:T(1,128)}', space=vmem, size = 0x12000, scoped, tag = 'internal scratch']
  #allocation2 [shape = 'f32[1,8,64]{2,1,0:T(8,128)}', space=vmem, size = 0x1000, scoped, tag = 'scratch operand']
  #allocation3 [shape = 'f32[1,64]{1,0:T(1,128)}', space=vmem, size = 0x200, scoped, tag = 'scratch operand']
  #allocation4 [shape = 'f32[1,64]{1,0:T(1,128)}', space=vmem, size = 0x200, scoped, tag = 'scratch operand']
  #allocation5 [shape = 'f32[1,64]{1,0:T(1,128)}', space=vmem, size = 0x200, scoped, tag = 'scratch operand']
  #allocation6 [shape = 'f32[1,1]{1,0:T(1,128)}', space=vmem, size = 0x200, scoped, tag = 'scratch operand']
  #allocation7 [shape = 'f32[1,1]{1,0:T(1,128)S(1)}', space=vmem, size = 0x200, scoped, tag = 'scoped memory for tpu_custom_call.1']
  %s0 = inlined_call_operand.hbm [shape: f32[8,16], index: 0, kind: input, shape index: {}]
  %s1 = inlined_call_operand.hbm [shape: f32[8,8], index: 1, kind: input, shape index: {}]
  %s2 = inlined_call_operand.hbm [shape: f32[16,64], index: 2, kind: input, shape index: {}]
  %s3 = inlined_call_operand.hbm [shape: f32[8,64], index: 3, kind: input, shape index: {}]
  %s4 = inlined_call_operand.vmem [shape: f32[1,64], index: 4, kind: input, shape index: {}]
  %s5 = inlined_call_operand.hbm [shape: f32[64,64], index: 5, kind: input, shape index: {}]
  %s6 = inlined_call_operand.vmem [shape: f32[1,64], index: 6, kind: input, shape index: {}]
  %s7 = inlined_call_operand.vmem [shape: f32[1,64], index: 7, kind: input, shape index: {}]
  %s8 = inlined_call_operand.vmem [shape: f32[1,64], index: 8, kind: input, shape index: {}]
  %s9 = inlined_call_operand.<no memory space> [shape: f32[1,1], index: 9, kind: input, shape index: {}]
  %s10 = inlined_call_operand.hbm [shape: f32[1,1,8], index: 10, kind: output, shape index: {}]
  %s11 = sld [smem:[#allocation0]]
  $region109: #{tpu_custom_call.1} parent=0
    _
  %s13 = ssub.s32 1, %s11
  %s14 = scalar_select 0, %s13, %s11
  %v15 = vstv %s9
  %16 = vst [vmem:[#allocation7] sm:$0x1] %v15
  $region1: #{tpu_custom_call.1} parent=0
    #allocation8 [shape = 'u8[8192]{0}', space=vmem, size = 0x2000, scoped, tag = 'input window, operand 0']
    #allocation9 [shape = 's32[2]{0}', space=sflag, size = 0x8, scoped, tag = 'scoped memory for tpu_custom_call.1']
    #allocation10 [shape = 's32[2]{0}', space=sflag, size = 0x8, scoped, tag = 'scoped memory for tpu_custom_call.1']
    #allocation11 [shape = 'u8[8192]{0}', space=vmem, size = 0x2000, scoped, tag = 'input window, operand 1']
    #allocation12 [shape = 's32[2]{0}', space=sflag, size = 0x8, scoped, tag = 'scoped memory for tpu_custom_call.1']
    #allocation13 [shape = 'u8[8192]{0}', space=vmem, size = 0x2000, scoped, tag = 'input window, operand 2, single buffered']
    #allocation14 [shape = 'u8[4096]{0}', space=vmem, size = 0x1000, scoped, tag = 'input window, operand 3, single buffered']
    #allocation15 [shape = 's32[1]{0}', space=sflag, size = 0x4, scoped, tag = 'scoped memory for tpu_custom_call.1']
    #allocation16 [shape = 'u8[32768]{0}', space=vmem, size = 0x8000, scoped, tag = 'input window, operand 5, single buffered']
    #allocation17 [shape = 'u8[1024]{0}', space=vmem, size = 0x400, scoped, tag = 'output window, operand 0']
    %17 = vsyncpa [#allocation9], 0
    %s18 = scalar_lea.sflag [#allocation9], 1
    %19 = vsyncpa %s18, 0
    %20 = vsyncpa [#allocation12], 0
    %s21 = scalar_lea.sflag [#allocation12], 1
    %22 = vsyncpa %s21, 0
    %23 = vsyncpa [#allocation15], 0
    %24 = vsyncpa [#allocation10], 0
    %s25 = scalar_lea.sflag [#allocation10], 1
    %26 = vsyncpa %s25, 0
    loop: start=0, step=1, limit=4
    $region2: #{tpu_custom_call.1} parent=1 // loop_pre_header
      _
    $region3: #{tpu_custom_call.1} parent=1 // loop_header
      %s28 = sphi 0, %s32
      %p29 = scmp.ge.s32.totalorder %s28, 4
      %s35 = sphi 0, %s47
      %s36 = sphi 0, %s43
      %s37 = sphi 0, %s35
      %s38 = sphi 0, %s36
      %s39 = sphi 0, %s37
      %s40 = sphi 0, %s38
      %s54 = sphi 0, %s56
      %s57 = sphi 0, %s54
      %s58 = sphi 0, %s57
      %s74 = sphi 0, %s58
      %s84 = sphi 0, %s86
      %s87 = sphi 0, %s84
      %s88 = sphi 0, %s87
      %s104 = sphi 0, %s88
      %s108 = sphi 0, %s108
      %s110 = sphi 0, %s108
      %s111 = sphi 0, %s110
      %s125 = sphi 0, %s111
      %s129 = sphi 0, %s129
      %s131 = sphi 0, %s129
      %s132 = sphi 0, %s131
      %s146 = sphi 0, %s132
      %s150 = sphi 0, %s150
      %s152 = sphi 0, %s150
      %s153 = sphi 0, %s152
      %s167 = sphi 0, %s153
      %s171 = sphi 0, %s171
      %s173 = sphi 0, %s171
      %s174 = sphi 0, %s173
      %s188 = sphi 0, %s174
      %s192 = sphi 0, %s192
      %s194 = sphi 0, %s192
      %s195 = sphi 0, %s194
      %s209 = sphi 0, %s195
      %s213 = sphi 0, %s213
      %s215 = sphi 0, %s213
      %s216 = sphi 0, %s215
      %s230 = sphi 0, %s216
      %s234 = sphi 0, %s234
      %s236 = sphi 0, %s234
      %s237 = sphi 0, %s236
      %s251 = sphi 0, %s237
      %s255 = sphi 0, %s255
      %s257 = sphi 0, %s255
      %s258 = sphi 0, %s257
      %s272 = sphi 0, %s258
      %s280 = sphi 0, %s282
      %s283 = sphi 0, %s280
      %s284 = sphi 0, %s283
      %s300 = sphi 0, %s284
    $region4: #{tpu_custom_call.1} parent=1 // loop_header_branch
      %31 = sbr.rel (%p29) target = $region8
    $region5: #{tpu_custom_call.1} parent=1 // loop_body
      %s33 = ssub.s32 %s28, 1
      %s34 = ssub.s32 %s28, 2
      %s41 = sadd.s32 1, %s36
      %p42 = scmp.ge.s32.totalorder %s41, 1
      %s43 = scalar_select %p42, 0, %s41
      %s44 = sadd.s32 1, %s35
      %s45 = scalar_select %p42, %s44, %s35
      %p46 = scmp.ge.s32.totalorder %s45, 2
      %s47 = scalar_select %p46, 0, %s45
      %s48 = ssub.s32 1, %s35
      %s49 = smul.u32 %s48, %s36
      %s50 = ssub.s32 1, %s47
      %s51 = smul.u32 %s50, %s43
      %s52 = ssub.s32 %s49, %s51
      %p53 = scmp.eq.s32.totalorder %s52, 0
      %s55 = sadd.s32 %s54, 1
      %s56 = scalar_select %p53, %s54, %s55
      %p59 = pneg %p53
      %p60 = scmp.eq.s32.totalorder %s28, 1
      %p61 = por %p59, %p60
      %p62 = scmp.ne.s32.totalorder %s54, %s57
      %p63 = scmp.eq.s32.totalorder %s28, 0
      %p64 = por %p62, %p63
      %p65 = scmp.ne.s32.totalorder %s54, %s57
      %p66 = scmp.eq.s32.totalorder %s33, 1
      %p67 = por %p65, %p66
      %p68 = scmp.ne.s32.totalorder %s57, %s58
      %p69 = scmp.eq.s32.totalorder %s33, 0
      %p70 = por %p68, %p69
      %p71 = scmp.ne.s32.totalorder %s57, %s58
      %p72 = scmp.eq.s32.totalorder %s34, 1
      %p73 = por %p71, %p72
      %p75 = scmp.ne.s32.totalorder %s58, %s74
      %p76 = scmp.eq.s32.totalorder %s34, 0
      %p77 = por %p75, %p76
      %s78 = ssub.s32 1, %s35
      %s79 = smul.u32 %s78, %s36
      %s80 = ssub.s32 1, %s47
      %s81 = smul.u32 %s80, %s43
      %s82 = ssub.s32 %s79, %s81
      %p83 = scmp.eq.s32.totalorder %s82, 0
      %s85 = sadd.s32 %s84, 1
      %s86 = scalar_select %p83, %s84, %s85
      %p89 = pneg %p83
      %p90 = scmp.eq.s32.totalorder %s28, 1
      %p91 = por %p89, %p90
      %p92 = scmp.ne.s32.totalorder %s84, %s87
      %p93 = scmp.eq.s32.totalorder %s28, 0
      %p94 = por %p92, %p93
      %p95 = scmp.ne.s32.totalorder %s84, %s87
      %p96 = scmp.eq.s32.totalorder %s33, 1
      %p97 = por %p95, %p96
      %p98 = scmp.ne.s32.totalorder %s87, %s88
      %p99 = scmp.eq.s32.totalorder %s33, 0
      %p100 = por %p98, %p99
      %p101 = scmp.ne.s32.totalorder %s87, %s88
      %p102 = scmp.eq.s32.totalorder %s34, 1
      %p103 = por %p101, %p102
      %p105 = scmp.ne.s32.totalorder %s88, %s104
      %p106 = scmp.eq.s32.totalorder %s34, 0
      %p107 = por %p105, %p106
      %s109 = sadd.s32 %s108, 1
      %p112 = scmp.eq.s32.totalorder %s28, 1
      %p113 = scmp.ne.s32.totalorder %s108, %s110
      %p114 = scmp.eq.s32.totalorder %s28, 0
      %p115 = por %p113, %p114
      %p116 = scmp.ne.s32.totalorder %s108, %s110
      %p117 = scmp.eq.s32.totalorder %s33, 1
      %p118 = por %p116, %p117
      %p119 = scmp.ne.s32.totalorder %s110, %s111
      %p120 = scmp.eq.s32.totalorder %s33, 0
      %p121 = por %p119, %p120
      %p122 = scmp.ne.s32.totalorder %s110, %s111
      %p123 = scmp.eq.s32.totalorder %s34, 1
      %p124 = por %p122, %p123
      %p126 = scmp.ne.s32.totalorder %s111, %s125
      %p127 = scmp.eq.s32.totalorder %s34, 0
      %p128 = por %p126, %p127
      %s130 = sadd.s32 %s129, 1
      %p133 = scmp.eq.s32.totalorder %s28, 1
      %p134 = scmp.ne.s32.totalorder %s129, %s131
      %p135 = scmp.eq.s32.totalorder %s28, 0
      %p136 = por %p134, %p135
      %p137 = scmp.ne.s32.totalorder %s129, %s131
      %p138 = scmp.eq.s32.totalorder %s33, 1
      %p139 = por %p137, %p138
      %p140 = scmp.ne.s32.totalorder %s131, %s132
      %p141 = scmp.eq.s32.totalorder %s33, 0
      %p142 = por %p140, %p141
      %p143 = scmp.ne.s32.totalorder %s131, %s132
      %p144 = scmp.eq.s32.totalorder %s34, 1
      %p145 = por %p143, %p144
      %p147 = scmp.ne.s32.totalorder %s132, %s146
      %p148 = scmp.eq.s32.totalorder %s34, 0
      %p149 = por %p147, %p148
      %s151 = sadd.s32 %s150, 1
      %p154 = scmp.eq.s32.totalorder %s28, 1
      %p155 = scmp.ne.s32.totalorder %s150, %s152
      %p156 = scmp.eq.s32.totalorder %s28, 0
      %p157 = por %p155, %p156
      %p158 = scmp.ne.s32.totalorder %s150, %s152
      %p159 = scmp.eq.s32.totalorder %s33, 1
      %p160 = por %p158, %p159
      %p161 = scmp.ne.s32.totalorder %s152, %s153
      %p162 = scmp.eq.s32.totalorder %s33, 0
      %p163 = por %p161, %p162
      %p164 = scmp.ne.s32.totalorder %s152, %s153
      %p165 = scmp.eq.s32.totalorder %s34, 1
      %p166 = por %p164, %p165
      %p168 = scmp.ne.s32.totalorder %s153, %s167
      %p169 = scmp.eq.s32.totalorder %s34, 0
      %p170 = por %p168, %p169
      %s172 = sadd.s32 %s171, 1
      %p175 = scmp.eq.s32.totalorder %s28, 1
      %p176 = scmp.ne.s32.totalorder %s171, %s173
      %p177 = scmp.eq.s32.totalorder %s28, 0
      %p178 = por %p176, %p177
      %p179 = scmp.ne.s32.totalorder %s171, %s173
      %p180 = scmp.eq.s32.totalorder %s33, 1
      %p181 = por %p179, %p180
      %p182 = scmp.ne.s32.totalorder %s173, %s174
      %p183 = scmp.eq.s32.totalorder %s33, 0
      %p184 = por %p182, %p183
      %p185 = scmp.ne.s32.totalorder %s173, %s174
      %p186 = scmp.eq.s32.totalorder %s34, 1
      %p187 = por %p185, %p186
      %p189 = scmp.ne.s32.totalorder %s174, %s188
      %p190 = scmp.eq.s32.totalorder %s34, 0
      %p191 = por %p189, %p190
      %s193 = sadd.s32 %s192, 1
      %p196 = scmp.eq.s32.totalorder %s28, 1
      %p197 = scmp.ne.s32.totalorder %s192, %s194
      %p198 = scmp.eq.s32.totalorder %s28, 0
      %p199 = por %p197, %p198
      %p200 = scmp.ne.s32.totalorder %s192, %s194
      %p201 = scmp.eq.s32.totalorder %s33, 1
      %p202 = por %p200, %p201
      %p203 = scmp.ne.s32.totalorder %s194, %s195
      %p204 = scmp.eq.s32.totalorder %s33, 0
      %p205 = por %p203, %p204
      %p206 = scmp.ne.s32.totalorder %s194, %s195
      %p207 = scmp.eq.s32.totalorder %s34, 1
      %p208 = por %p206, %p207
      %p210 = scmp.ne.s32.totalorder %s195, %s209
      %p211 = scmp.eq.s32.totalorder %s34, 0
      %p212 = por %p210, %p211
      %s214 = sadd.s32 %s213, 1
      %p217 = scmp.eq.s32.totalorder %s28, 1
      %p218 = scmp.ne.s32.totalorder %s213, %s215
      %p219 = scmp.eq.s32.totalorder %s28, 0
      %p220 = por %p218, %p219
      %p221 = scmp.ne.s32.totalorder %s213, %s215
      %p222 = scmp.eq.s32.totalorder %s33, 1
      %p223 = por %p221, %p222
      %p224 = scmp.ne.s32.totalorder %s215, %s216
      %p225 = scmp.eq.s32.totalorder %s33, 0
      %p226 = por %p224, %p225
      %p227 = scmp.ne.s32.totalorder %s215, %s216
      %p228 = scmp.eq.s32.totalorder %s34, 1
      %p229 = por %p227, %p228
      %p231 = scmp.ne.s32.totalorder %s216, %s230
      %p232 = scmp.eq.s32.totalorder %s34, 0
      %p233 = por %p231, %p232
      %s235 = sadd.s32 %s234, 1
      %p238 = scmp.eq.s32.totalorder %s28, 1
      %p239 = scmp.ne.s32.totalorder %s234, %s236
      %p240 = scmp.eq.s32.totalorder %s28, 0
      %p241 = por %p239, %p240
      %p242 = scmp.ne.s32.totalorder %s234, %s236
      %p243 = scmp.eq.s32.totalorder %s33, 1
      %p244 = por %p242, %p243
      %p245 = scmp.ne.s32.totalorder %s236, %s237
      %p246 = scmp.eq.s32.totalorder %s33, 0
      %p247 = por %p245, %p246
      %p248 = scmp.ne.s32.totalorder %s236, %s237
      %p249 = scmp.eq.s32.totalorder %s34, 1
      %p250 = por %p248, %p249
      %p252 = scmp.ne.s32.totalorder %s237, %s251
      %p253 = scmp.eq.s32.totalorder %s34, 0
      %p254 = por %p252, %p253
      %s256 = sadd.s32 %s255, 1
      %p259 = scmp.eq.s32.totalorder %s28, 1
      %p260 = scmp.ne.s32.totalorder %s255, %s257
      %p261 = scmp.eq.s32.totalorder %s28, 0
      %p262 = por %p260, %p261
      %p263 = scmp.ne.s32.totalorder %s255, %s257
      %p264 = scmp.eq.s32.totalorder %s33, 1
      %p265 = por %p263, %p264
      %p266 = scmp.ne.s32.totalorder %s257, %s258
      %p267 = scmp.eq.s32.totalorder %s33, 0
      %p268 = por %p266, %p267
      %p269 = scmp.ne.s32.totalorder %s257, %s258
      %p270 = scmp.eq.s32.totalorder %s34, 1
      %p271 = por %p269, %p270
      %p273 = scmp.ne.s32.totalorder %s258, %s272
      %p274 = scmp.eq.s32.totalorder %s34, 0
      %p275 = por %p273, %p274
      %s276 = smul.u32 %s35, %s36
      %s277 = smul.u32 %s47, %s43
      %s278 = ssub.s32 %s276, %s277
      %p279 = scmp.eq.s32.totalorder %s278, 0
      %s281 = sadd.s32 %s280, 1
      %s282 = scalar_select %p279, %s280, %s281
      %p285 = pneg %p279
      %p286 = scmp.eq.s32.totalorder %s28, 1
      %p287 = por %p285, %p286
      %p288 = scmp.ne.s32.totalorder %s280, %s283
      %p289 = scmp.eq.s32.totalorder %s28, 0
      %p290 = por %p288, %p289
      %p291 = scmp.ne.s32.totalorder %s280, %s283
      %p292 = scmp.eq.s32.totalorder %s33, 1
      %p293 = por %p291, %p292
      %p294 = scmp.ne.s32.totalorder %s283, %s284
      %p295 = scmp.eq.s32.totalorder %s33, 0
      %p296 = por %p294, %p295
      %p297 = scmp.ne.s32.totalorder %s283, %s284
      %p298 = scmp.eq.s32.totalorder %s34, 1
      %p299 = por %p297, %p298
      %p301 = scmp.ne.s32.totalorder %s284, %s300
      %p302 = scmp.eq.s32.totalorder %s34, 0
      %p303 = por %p301, %p302
      %p304 = scmp.le.s32.totalorder 1, %s28
      %p305 = scmp.lt.s32.totalorder %s28, 3
      %p306 = pnand %p304, %p305
      %p307 = pneg %p306
      // Predicated region
      $region9: #{tpu_custom_call.1} parent=5 // pred_check
        _
      $region10: #{tpu_custom_call.1} parent=5 // pred_check_branch
        %309 = sbr.rel (%p306) target = $region12
      $region11: #{tpu_custom_call.1} parent=5 // pred_region
        %s310 = ssub.s32 %s28, 1
        // Predicated region
        $region13: #{tpu_custom_call.1} parent=11 // pred_check
          %p311 = pneg %p121
        $region14: #{tpu_custom_call.1} parent=11 // pred_check_branch
          %313 = sbr.rel (%p311) target = $region16
        $region15: #{tpu_custom_call.1} parent=11 // pred_region
          %s315 = ssub.s32 256, 256
          %316 = vsyncadd [#allocation12], %s315
          %s317 = sshll.u32 [#allocation13], 4
          %s318 = int_to_ptr.vmem [resolvable:$true] %s317
          %323 = dma.hbm_to_vmem [thread:$0]  %s2, 256, %s318, [#allocation12], 128, 128, 8
        $region16: #{tpu_custom_call.1} parent=11 // pred_fallthru
          _
        // Predicated region
        $region17: #{tpu_custom_call.1} parent=11 // pred_check
          %p324 = pneg %p142
        $region18: #{tpu_custom_call.1} parent=11 // pred_check_branch
          %326 = sbr.rel (%p324) target = $region20
        $region19: #{tpu_custom_call.1} parent=11 // pred_region
          %s328 = ssub.s32 128, 128
          %329 = vsyncadd [#allocation15], %s328
          %s331 = sshll.u32 [#allocation14], 4
          %s332 = int_to_ptr.vmem [resolvable:$true] %s331
          %334 = dma.hbm_to_vmem [thread:$0]  %s3, 128, %s332, [#allocation15]
        $region20: #{tpu_custom_call.1} parent=11 // pred_fallthru
          _
        // Predicated region
        $region21: #{tpu_custom_call.1} parent=11 // pred_check
          %p335 = pneg %p163
        $region22: #{tpu_custom_call.1} parent=11 // pred_check_branch
          %337 = sbr.rel (%p335) target = $region24
        $region23: #{tpu_custom_call.1} parent=11 // pred_region
          _
        $region24: #{tpu_custom_call.1} parent=11 // pred_fallthru
          _
        // Predicated region
        $region25: #{tpu_custom_call.1} parent=11 // pred_check
          %p338 = pneg %p184
        $region26: #{tpu_custom_call.1} parent=11 // pred_check_branch
          %340 = sbr.rel (%p338) target = $region28
        $region27: #{tpu_custom_call.1} parent=11 // pred_region
          %s342 = ssub.s32 1024, 1024
          %343 = vsyncadd [#allocation15], %s342
          %s344 = sshll.u32 [#allocation16], 4
          %s345 = int_to_ptr.vmem [resolvable:$true] %s344
          %350 = dma.hbm_to_vmem [thread:$0]  %s5, 1024, %s345, [#allocation15], 128, 128, 8
        $region28: #{tpu_custom_call.1} parent=11 // pred_fallthru
          _
        // Predicated region
        $region29: #{tpu_custom_call.1} parent=11 // pred_check
          %p351 = pneg %p205
        $region30: #{tpu_custom_call.1} parent=11 // pred_check_branch
          %353 = sbr.rel (%p351) target = $region32
        $region31: #{tpu_custom_call.1} parent=11 // pred_region
          _
        $region32: #{tpu_custom_call.1} parent=11 // pred_fallthru
          _
        // Predicated region
        $region33: #{tpu_custom_call.1} parent=11 // pred_check
          %p354 = pneg %p226
        $region34: #{tpu_custom_call.1} parent=11 // pred_check_branch
          %356 = sbr.rel (%p354) target = $region36
        $region35: #{tpu_custom_call.1} parent=11 // pred_region
          _
        $region36: #{tpu_custom_call.1} parent=11 // pred_fallthru
          _
        // Predicated region
        $region37: #{tpu_custom_call.1} parent=11 // pred_check
          %p357 = pneg %p247
        $region38: #{tpu_custom_call.1} parent=11 // pred_check_branch
          %359 = sbr.rel (%p357) target = $region40
        $region39: #{tpu_custom_call.1} parent=11 // pred_region
          _
        $region40: #{tpu_custom_call.1} parent=11 // pred_fallthru
          _
        // Predicated region
        $region41: #{tpu_custom_call.1} parent=11 // pred_check
          %p360 = pneg %p268
        $region42: #{tpu_custom_call.1} parent=11 // pred_check_branch
          %362 = sbr.rel (%p360) target = $region44
        $region43: #{tpu_custom_call.1} parent=11 // pred_region
          _
        $region44: #{tpu_custom_call.1} parent=11 // pred_fallthru
          _
      $region12: #{tpu_custom_call.1} parent=5 // pred_fallthru
        _
      %p363 = scmp.lt.s32.totalorder %s28, 2
      // Predicated region
      $region45: #{tpu_custom_call.1} parent=5 // pred_check
        %p364 = pneg %p363
      $region46: #{tpu_custom_call.1} parent=5 // pred_check_branch
        %366 = sbr.rel (%p364) target = $region48
      $region47: #{tpu_custom_call.1} parent=5 // pred_region
        // Predicated region
        $region49: #{tpu_custom_call.1} parent=47 // pred_check
          %p367 = pneg %p64
        $region50: #{tpu_custom_call.1} parent=47 // pred_check_branch
          %369 = sbr.rel (%p367) target = $region52
        $region51: #{tpu_custom_call.1} parent=47 // pred_region
          %s370 = sand.u32 %s54, 1
          %s371 = scalar_lea.sflag [#allocation9], %s370
          %s372 = sand.u32 %s54, 1
          %s373 = smul.addr %s372, 8
          %s374 = scalar_lea.vmem [#allocation8], %s373
          %s375 = ssub.s32 1, %s35
          %s376 = smul.u32 %s375, %s36
          %s378 = ssub.s32 128, 128
          %379 = vsyncadd %s371, %s378
          %s380 = smul.addr %s376, 128
          %s381 = scalar_lea.hbm %s0, %s380
          %s383 = sshll.u32 %s374, 4
          %s384 = int_to_ptr.vmem [resolvable:$true] %s383
          %386 = dma.hbm_to_vmem [thread:$0]  %s381, 128, %s384, %s371
        $region52: #{tpu_custom_call.1} parent=47 // pred_fallthru
          _
        // Predicated region
        $region53: #{tpu_custom_call.1} parent=47 // pred_check
          %p387 = pneg %p94
        $region54: #{tpu_custom_call.1} parent=47 // pred_check_branch
          %389 = sbr.rel (%p387) target = $region56
        $region55: #{tpu_custom_call.1} parent=47 // pred_region
          %s390 = sand.u32 %s28, 1
          %s391 = scalar_lea.sflag [#allocation12], %s390
          %s392 = sand.u32 %s84, 1
          %s393 = smul.addr %s392, 8
          %s394 = scalar_lea.vmem [#allocation11], %s393
          %s395 = ssub.s32 1, %s35
          %s396 = smul.u32 %s395, %s36
          %s398 = ssub.s32 128, 128
          %399 = vsyncadd %s391, %s398
          %s400 = smul.addr %s396, 128
          %s401 = scalar_lea.hbm %s1, %s400
          %s403 = sshll.u32 %s394, 4
          %s404 = int_to_ptr.vmem [resolvable:$true] %s403
          %406 = dma.hbm_to_vmem [thread:$0]  %s401, 128, %s404, %s391
        $region56: #{tpu_custom_call.1} parent=47 // pred_fallthru
          _
      $region48: #{tpu_custom_call.1} parent=5 // pred_fallthru
        _
      %p407 = scmp.le.s32.totalorder 1, %s28
      %p408 = scmp.lt.s32.totalorder %s28, 3
      %p409 = pnand %p407, %p408
      %p410 = pneg %p409
      // Predicated region
      $region57: #{tpu_custom_call.1} parent=5 // pred_check
        _
      $region58: #{tpu_custom_call.1} parent=5 // pred_check_branch
        %412 = sbr.rel (%p409) target = $region60
      $region59: #{tpu_custom_call.1} parent=5 // pred_region
        %s413 = ssub.s32 %s28, 1
        %s414 = sand.u32 %s57, 1
        %s415 = scalar_lea.sflag [#allocation9], %s414
        %s416 = sand.u32 %s57, 1
        %s417 = smul.addr %s416, 8
        %s418 = scalar_lea.vmem [#allocation8], %s417
        // Predicated region
        $region61: #{tpu_custom_call.1} parent=59 // pred_check
          %p419 = pneg %p70
        $region62: #{tpu_custom_call.1} parent=59 // pred_check_branch
          %421 = sbr.rel (%p419) target = $region64
        $region63: #{tpu_custom_call.1} parent=59 // pred_region
          %422 = dma.done %s415, 128
        $region64: #{tpu_custom_call.1} parent=59 // pred_fallthru
          _
        %s423 = sand.u32 %s33, 1
        %s424 = scalar_lea.sflag [#allocation12], %s423
        %s425 = sand.u32 %s87, 1
        %s426 = smul.addr %s425, 8
        %s427 = scalar_lea.vmem [#allocation11], %s426
        // Predicated region
        $region65: #{tpu_custom_call.1} parent=59 // pred_check
          %p428 = pneg %p100
        $region66: #{tpu_custom_call.1} parent=59 // pred_check_branch
          %430 = sbr.rel (%p428) target = $region68
        $region67: #{tpu_custom_call.1} parent=59 // pred_region
          %431 = dma.done %s424, 128
        $region68: #{tpu_custom_call.1} parent=59 // pred_fallthru
          _
        // Predicated region
        $region69: #{tpu_custom_call.1} parent=59 // pred_check
          %p432 = pneg %p121
        $region70: #{tpu_custom_call.1} parent=59 // pred_check_branch
          %434 = sbr.rel (%p432) target = $region72
        $region71: #{tpu_custom_call.1} parent=59 // pred_region
          %435 = dma.done [#allocation12], 256
        $region72: #{tpu_custom_call.1} parent=59 // pred_fallthru
          _
        // Predicated region
        $region73: #{tpu_custom_call.1} parent=59 // pred_check
          %p436 = pneg %p142
        $region74: #{tpu_custom_call.1} parent=59 // pred_check_branch
          %438 = sbr.rel (%p436) target = $region76
        $region75: #{tpu_custom_call.1} parent=59 // pred_region
          %439 = dma.done [#allocation15], 128
        $region76: #{tpu_custom_call.1} parent=59 // pred_fallthru
          _
        // Predicated region
        $region77: #{tpu_custom_call.1} parent=59 // pred_check
          %p440 = pneg %p184
        $region78: #{tpu_custom_call.1} parent=59 // pred_check_branch
          %442 = sbr.rel (%p440) target = $region80
        $region79: #{tpu_custom_call.1} parent=59 // pred_region
          %443 = dma.done [#allocation15], 1024
        $region80: #{tpu_custom_call.1} parent=59 // pred_fallthru
          _
        %s444 = sand.u32 %s57, 1
        %s445 = scalar_lea.sflag [#allocation9], %s444
        %s446 = sand.u32 %s57, 1
        %s447 = smul.addr %s446, 8
        %s448 = scalar_lea.vmem [#allocation8], %s447
        %p449 = pneg %p70
        %p450 = pneg %p67
        %s451 = sand.u32 %s33, 1
        %s452 = scalar_lea.sflag [#allocation12], %s451
        %s453 = sand.u32 %s87, 1
        %s454 = smul.addr %s453, 8
        %s455 = scalar_lea.vmem [#allocation11], %s454
        %p456 = pneg %p100
        %p457 = pneg %p97
        %p458 = pneg %p121
        %p459 = pneg %p118
        %p460 = pneg %p142
        %p461 = pneg %p139
        %p462 = pneg %p163
        %p463 = pneg %p160
        %p464 = pneg %p184
        %p465 = pneg %p181
        %p466 = pneg %p205
        %p467 = pneg %p202
        %p468 = pneg %p226
        %p469 = pneg %p223
        %p470 = pneg %p247
        %p471 = pneg %p244
        %p472 = pneg %p268
        %p473 = pneg %p265
        %p474 = pneg %p296
        %p475 = pneg %p293
        %s476 = sand.u32 %s283, 1
        %s477 = scalar_lea.sflag [#allocation10], %s476
        %s478 = sand.u32 %s283, 1
        %s479 = scalar_lea.vmem [#allocation17], %s478
        %s480 = ssub.s32 1, %s37
        %s481 = smul.u32 %s480, %s38
        %s482 = ssub.s32 1, %s37
        %s483 = smul.u32 %s482, %s38
        %s484 = smul.u32 %s37, %s38
        %p485 = scmp.eq.s32.totalorder %s37, 0
        // Predicated region
        $region81: #{tpu_custom_call.1} parent=59 // pred_check
          %p486 = pneg %p485
        $region82: #{tpu_custom_call.1} parent=59 // pred_check_branch
          %488 = sbr.rel (%p486) target = $region84
        $region83: #{tpu_custom_call.1} parent=59 // pred_region
          %p489 = scmp.eq.s32.totalorder %s38, 0
          // Predicated region
          $region85: #{tpu_custom_call.1} parent=83 // pred_check
            %p490 = pneg %p489
          $region86: #{tpu_custom_call.1} parent=83 // pred_check_branch
            %492 = sbr.rel (%p490) target = $region88
          $region87: #{tpu_custom_call.1} parent=83 // pred_region
            %vm493 = vcmask 516096
            %494 = vst.msk [vmem:[#allocation3] sm:$0x1] %vm493, 0.0
            %495 = vst.msk [vmem:[#allocation4] sm:$0x1] %vm493, 0.0
          $region88: #{tpu_custom_call.1} parent=83 // pred_fallthru
            _
          %v496 = vld [vmem:[%s418] sm:$0xff]
          %v497 = vld [vmem:[#allocation13] sm:$0xff]
          %v498 = vld [vmem:[#allocation13 + $0x8] sm:$0xff]
          %v499 = vld [vmem:[%s427] sm:$0xff]
          %v500 = vld [vmem:[#allocation14] sm:$0xff]
          %vm501 = vcmask 64512
          %v503 = vsel %vm501, %v499, 0
          %505 = vmatprep.subr.mxu0 0.0
          %506 = vmatpush1.msra.mxu0 0.0
          %507 = vmatprep.subr.mxu0 0.0
          %508 = vmatpush1.msra.mxu0 0.0
          %509 = vmatprep.subr.mxu0 0.0
          %510 = vmatpush1.msra.mxu0 0.0
          %511 = vmatprep.subr.mxu0 0.0
          %512 = vmatpush1.msra.mxu0 0.0
          %513 = vmatprep.subr.mxu0 0.0
          %514 = vmatpush1.msra.mxu0 0.0
          %515 = vmatprep.subr.mxu0 0.0
          %516 = vmatpush1.msra.mxu0 0.0
          %517 = vmatprep.subr.mxu0 0.0
          %518 = vmatpush1.msra.mxu0 0.0
          %519 = vmatprep.subr.mxu0 0.0
          %520 = vmatpush1.msra.mxu0 0.0
          %521 = vmatprep.subr.mxu0 0.0
          %522 = vmatpush1.msra.mxu0 0.0
          %523 = vmatprep.subr.mxu0 0.0
          %524 = vmatpush1.msra.mxu0 0.0
          %525 = vmatprep.subr.mxu0 0.0
          %526 = vmatpush1.msra.mxu0 0.0
          %527 = vmatprep.subr.mxu0 0.0
          %528 = vmatpush1.msra.mxu0 0.0
          %529 = vmatprep.subr.mxu0 0.0
          %530 = vmatpush1.msra.mxu0 0.0
          %531 = vmatprep.subr.mxu0 0.0
          %532 = vmatpush1.msra.mxu0 0.0
          %533 = vmatprep.subr.mxu0 0.0
          %534 = vmatpush1.msra.mxu0 0.0
          %535 = vmatprep.subr.mxu0 0.0
          %536 = vmatpush1.msra.mxu0 %v500
          %537 = vmatprep.subr.mxu0 0.0
          %538 = vmatpush2.msra.mxu0 0.0
          %539 = vmatprep.subr.mxu0 0.0
          %540 = vmatpush2.msra.mxu0 0.0
          %541 = vmatprep.subr.mxu0 0.0
          %542 = vmatpush2.msra.mxu0 0.0
          %543 = vmatprep.subr.mxu0 0.0
          %544 = vmatpush2.msra.mxu0 0.0
          %545 = vmatprep.subr.mxu0 0.0
          %546 = vmatpush2.msra.mxu0 0.0
          %547 = vmatprep.subr.mxu0 0.0
          %548 = vmatpush2.msra.mxu0 0.0
          %549 = vmatprep.subr.mxu0 0.0
          %550 = vmatpush2.msra.mxu0 0.0
          %551 = vmatprep.subr.mxu0 0.0
          %552 = vmatpush2.msra.mxu0 0.0
          %553 = vmatprep.subr.mxu0 0.0
          %554 = vmatpush2.msra.mxu0 0.0
          %555 = vmatprep.subr.mxu0 0.0
          %556 = vmatpush2.msra.mxu0 0.0
          %557 = vmatprep.subr.mxu0 0.0
          %558 = vmatpush2.msra.mxu0 0.0
          %559 = vmatprep.subr.mxu0 0.0
          %560 = vmatpush2.msra.mxu0 0.0
          %561 = vmatprep.subr.mxu0 0.0
          %562 = vmatpush2.msra.mxu0 0.0
          %563 = vmatprep.subr.mxu0 0.0
          %564 = vmatpush2.msra.mxu0 0.0
          %565 = vmatprep.subr.mxu0 0.0
          %566 = vmatpush2.msra.mxu0 0.0
          %567 = vmatprep.subr.mxu0 0.0
          %568 = vmatpush2.msra.mxu0 0.0
          %569 = vmatprep.mubr.f32.mxu0 0.0
          %570 = vmatmul.mubr.f32.gmra.mxu0 %v503
          %v571 = vpop.f32.mrf.mxu0
          %v572 = vadd.f32 0.0, %v571
          %v573 = vpop.f32.mrf.mxu0
          %574 = vdwg.mxu0
          %vm575 = vcmask 130048
          %v577 = vsel %vm575, %v496, 0
          %579 = vmatprep.subr.mxu0 0.0
          %580 = vmatpush1.msra.mxu0 0.0
          %581 = vmatprep.subr.mxu0 0.0
          %582 = vmatpush1.msra.mxu0 0.0
          %583 = vmatprep.subr.mxu0 0.0
          %584 = vmatpush1.msra.mxu0 0.0
          %585 = vmatprep.subr.mxu0 0.0
          %586 = vmatpush1.msra.mxu0 0.0
          %587 = vmatprep.subr.mxu0 0.0
          %588 = vmatpush1.msra.mxu0 0.0
          %589 = vmatprep.subr.mxu0 0.0
          %590 = vmatpush1.msra.mxu0 0.0
          %591 = vmatprep.subr.mxu0 0.0
          %592 = vmatpush1.msra.mxu0 0.0
          %593 = vmatprep.subr.mxu0 0.0
          %594 = vmatpush1.msra.mxu0 0.0
          %595 = vmatprep.subr.mxu0 0.0
          %596 = vmatpush1.msra.mxu0 0.0
          %597 = vmatprep.subr.mxu0 0.0
          %598 = vmatpush1.msra.mxu0 0.0
          %599 = vmatprep.subr.mxu0 0.0
          %600 = vmatpush1.msra.mxu0 0.0
          %601 = vmatprep.subr.mxu0 0.0
          %602 = vmatpush1.msra.mxu0 0.0
          %603 = vmatprep.subr.mxu0 0.0
          %604 = vmatpush1.msra.mxu0 0.0
          %605 = vmatprep.subr.mxu0 0.0
          %606 = vmatpush1.msra.mxu0 0.0
          %607 = vmatprep.subr.mxu0 0.0
          %608 = vmatpush1.msra.mxu0 %v498
          %609 = vmatprep.subr.mxu0 0.0
          %610 = vmatpush1.msra.mxu0 %v497
          %611 = vmatprep.subr.mxu0 0.0
          %612 = vmatpush2.msra.mxu0 0.0
          %613 = vmatprep.subr.mxu0 0.0
          %614 = vmatpush2.msra.mxu0 0.0
          %615 = vmatprep.subr.mxu0 0.0
          %616 = vmatpush2.msra.mxu0 0.0
          %617 = vmatprep.subr.mxu0 0.0
          %618 = vmatpush2.msra.mxu0 0.0
          %619 = vmatprep.subr.mxu0 0.0
          %620 = vmatpush2.msra.mxu0 0.0
          %621 = vmatprep.subr.mxu0 0.0
          %622 = vmatpush2.msra.mxu0 0.0
          %623 = vmatprep.subr.mxu0 0.0
          %624 = vmatpush2.msra.mxu0 0.0
          %625 = vmatprep.subr.mxu0 0.0
          %626 = vmatpush2.msra.mxu0 0.0
          %627 = vmatprep.subr.mxu0 0.0
          %628 = vmatpush2.msra.mxu0 0.0
          %629 = vmatprep.subr.mxu0 0.0
          %630 = vmatpush2.msra.mxu0 0.0
          %631 = vmatprep.subr.mxu0 0.0
          %632 = vmatpush2.msra.mxu0 0.0
          %633 = vmatprep.subr.mxu0 0.0
          %634 = vmatpush2.msra.mxu0 0.0
          %635 = vmatprep.subr.mxu0 0.0
          %636 = vmatpush2.msra.mxu0 0.0
          %637 = vmatprep.subr.mxu0 0.0
          %638 = vmatpush2.msra.mxu0 0.0
          %639 = vmatprep.subr.mxu0 0.0
          %640 = vmatpush2.msra.mxu0 0.0
          %641 = vmatprep.subr.mxu0 0.0
          %642 = vmatpush2.msra.mxu0 0.0
          %643 = vmatprep.mubr.f32.mxu0 0.0
          %644 = vmatmul.mubr.f32.gmra.mxu0 %v577
          %v645 = vpop.f32.mrf.mxu0
          %v646 = vadd.f32 %v572, %v645
          %v647 = vpop.f32.mrf.mxu0
          %648 = vdwg.mxu0
          %v649 = vld [vmem:[%s4] sm:$0x1]
          %v651 = vlaneseq
          %v652 = vshrl.u32 %v651, 7
          %v653 = vsub.s32 0, %v652
          %v654 = vrot.slane %v649, %v653
          %v656 = vadd.f32 %v646, %v654
          %v657 = vmax.f32 %v656, 0.0
          %v658 = vld [vmem:[#allocation16] sm:$0xff]
          %v659 = vld [vmem:[#allocation16 + $0x8] sm:$0xff]
          %v660 = vld [vmem:[#allocation16 + $0x10] sm:$0xff]
          %v661 = vld [vmem:[#allocation16 + $0x18] sm:$0xff]
          %v662 = vld [vmem:[#allocation16 + $0x20] sm:$0xff]
          %v663 = vld [vmem:[#allocation16 + $0x28] sm:$0xff]
          %v664 = vld [vmem:[#allocation16 + $0x30] sm:$0xff]
          %v665 = vld [vmem:[#allocation16 + $0x38] sm:$0xff]
          %v666 = vld [vmem:[%s6] sm:$0x1]
          %v668 = vlaneseq
          %v669 = vshrl.u32 %v668, 7
          %v670 = vsub.s32 0, %v669
          %v671 = vrot.slane %v666, %v670
          %vm673 = vcmask 523264
          %v675 = vsel %vm673, %v657, 0
          %677 = vmatprep.subr.mxu0 0.0
          %678 = vmatpush1.msra.mxu0 0.0
          %679 = vmatprep.subr.mxu0 0.0
          %680 = vmatpush1.msra.mxu0 0.0
          %681 = vmatprep.subr.mxu0 0.0
          %682 = vmatpush1.msra.mxu0 0.0
          %683 = vmatprep.subr.mxu0 0.0
          %684 = vmatpush1.msra.mxu0 0.0
          %685 = vmatprep.subr.mxu0 0.0
          %686 = vmatpush1.msra.mxu0 0.0
          %687 = vmatprep.subr.mxu0 0.0
          %688 = vmatpush1.msra.mxu0 0.0
          %689 = vmatprep.subr.mxu0 0.0
          %690 = vmatpush1.msra.mxu0 0.0
          %691 = vmatprep.subr.mxu0 0.0
          %692 = vmatpush1.msra.mxu0 0.0
          %693 = vmatprep.subr.mxu0 0.0
          %694 = vmatpush1.msra.mxu0 %v665
          %695 = vmatprep.subr.mxu0 0.0
          %696 = vmatpush1.msra.mxu0 %v664
          %697 = vmatprep.subr.mxu0 0.0
          %698 = vmatpush1.msra.mxu0 %v663
          %699 = vmatprep.subr.mxu0 0.0
          %700 = vmatpush1.msra.mxu0 %v662
          %701 = vmatprep.subr.mxu0 0.0
          %702 = vmatpush1.msra.mxu0 %v661
          %703 = vmatprep.subr.mxu0 0.0
          %704 = vmatpush1.msra.mxu0 %v660
          %705 = vmatprep.subr.mxu0 0.0
          %706 = vmatpush1.msra.mxu0 %v659
          %707 = vmatprep.subr.mxu0 0.0
          %708 = vmatpush1.msra.mxu0 %v658
          %709 = vmatprep.subr.mxu0 0.0
          %710 = vmatpush2.msra.mxu0 0.0
          %711 = vmatprep.subr.mxu0 0.0
          %712 = vmatpush2.msra.mxu0 0.0
          %713 = vmatprep.subr.mxu0 0.0
          %714 = vmatpush2.msra.mxu0 0.0
          %715 = vmatprep.subr.mxu0 0.0
          %716 = vmatpush2.msra.mxu0 0.0
          %717 = vmatprep.subr.mxu0 0.0
          %718 = vmatpush2.msra.mxu0 0.0
          %719 = vmatprep.subr.mxu0 0.0
          %720 = vmatpush2.msra.mxu0 0.0
          %721 = vmatprep.subr.mxu0 0.0
          %722 = vmatpush2.msra.mxu0 0.0
          %723 = vmatprep.subr.mxu0 0.0
          %724 = vmatpush2.msra.mxu0 0.0
          %725 = vmatprep.subr.mxu0 0.0
          %726 = vmatpush2.msra.mxu0 0.0
          %727 = vmatprep.subr.mxu0 0.0
          %728 = vmatpush2.msra.mxu0 0.0
          %729 = vmatprep.subr.mxu0 0.0
          %730 = vmatpush2.msra.mxu0 0.0
          %731 = vmatprep.subr.mxu0 0.0
          %732 = vmatpush2.msra.mxu0 0.0
          %733 = vmatprep.subr.mxu0 0.0
          %734 = vmatpush2.msra.mxu0 0.0
          %735 = vmatprep.subr.mxu0 0.0
          %736 = vmatpush2.msra.mxu0 0.0
          %737 = vmatprep.subr.mxu0 0.0
          %738 = vmatpush2.msra.mxu0 0.0
          %739 = vmatprep.subr.mxu0 0.0
          %740 = vmatpush2.msra.mxu0 0.0
          %741 = vmatprep.mubr.f32.mxu0 0.0
          %742 = vmatmul.mubr.f32.gmra.mxu0 %v675
          %v743 = vpop.f32.mrf.mxu0
          %v744 = vadd.f32 %v671, %v743
          %v745 = vpop.f32.mrf.mxu0
          %746 = vdwg.mxu0
          %s747 = smul.u32 %s38, 8
          %s748 = scalar_lea.vmem [#allocation2], %s747
          %749 = vst.msk [vmem:[%s748] sm:$0xff] %vm673, %v744
          %v750 = vld [vmem:[#allocation3] sm:$0x1]
          %v751 = vsel %vm673, %v744, 0.0
          %v752 = vrot.slane %v751, 4
          %v753 = vadd.f32 %v751, %v752
          %v754 = vrot.slane %v753, 2
          %v755 = vadd.f32 %v753, %v754
          %v756 = vrot.slane %v755, 1
          %v757 = vadd.f32 %v755, %v756
          %v758 = vadd.f32 %v750, %v757
          %vm759 = vcmask 516096
          %760 = vst.msk [vmem:[#allocation3] sm:$0x1] %vm759, %v758
          %v761 = vld [vmem:[#allocation4] sm:$0x1]
          %v762 = vmul.f32 %v744, %v744
          %v763 = vsel %vm673, %v762, 0.0
          %v764 = vrot.slane %v763, 4
          %v765 = vadd.f32 %v763, %v764
          %v766 = vrot.slane %v765, 2
          %v767 = vadd.f32 %v765, %v766
          %v768 = vrot.slane %v767, 1
          %v769 = vadd.f32 %v767, %v768
          %v770 = vadd.f32 %v761, %v769
          %771 = vst.msk [vmem:[#allocation4] sm:$0x1] %vm759, %v770
        $region84: #{tpu_custom_call.1} parent=59 // pred_fallthru
          _
        %p772 = scmp.eq.s32.totalorder %s37, 1
        %p773 = scmp.eq.s32.totalorder %s38, 0
        %p774 = pnand %p772, %p773
        %p775 = pneg %p774
        // Predicated region
        $region89: #{tpu_custom_call.1} parent=59 // pred_check
          _
        $region90: #{tpu_custom_call.1} parent=59 // pred_check_branch
          %777 = sbr.rel (%p774) target = $region92
        $region91: #{tpu_custom_call.1} parent=59 // pred_region
          %v778 = vld [vmem:[#allocation3] sm:$0x1]
          %v779 = vmul.f32 %v778, 0.125
          %v780 = vld [vmem:[#allocation4] sm:$0x1]
          %v781 = vmul.f32 %v780, 0.125
          %v782 = vmul.f32 %v779, %v779
          %v783 = vsub.f32 %v781, %v782
          %v784 = vmax.f32 %v783, 0.0
          %v785 = vadd.f32 %v784, 1e-05
          %v786 = vrsqrt.pop %v785
          %v787 = vld [vmem:[%s7] sm:$0x1]
          %v788 = vmul.f32 %v787, %v786
          %v789 = vld [vmem:[%s8] sm:$0x1]
          %v790 = vmul.f32 %v788, %v789
          %vm791 = vcmask 516096
          %792 = vst.msk [vmem:[#allocation5] sm:$0x1] %vm791, %v790
          %v793 = vld [vmem:[#allocation7] sm:$0x1]
          %v794 = vmul.f32 %v779, %v790
          %v795 = vsel %vm791, %v794, 0.0
          %796 = vadd.xlane.f32.xlu0 %v795
          %v797 = vpop.xlane.xlu0 %796
          %v798 = vsub.f32 %v793, %v797
          %vm799 = vcmask 0
          %800 = vst.msk [vmem:[#allocation6] sm:$0x1] %vm799, %v798
        $region92: #{tpu_custom_call.1} parent=59 // pred_fallthru
          _
        // Predicated region
        $region93: #{tpu_custom_call.1} parent=59 // pred_check
          %p801 = pneg %p772
        $region94: #{tpu_custom_call.1} parent=59 // pred_check_branch
          %803 = sbr.rel (%p801) target = $region96
        $region95: #{tpu_custom_call.1} parent=59 // pred_region
          %s804 = smul.u32 %s38, 8
          %s805 = scalar_lea.vmem [#allocation2], %s804
          %v806 = vld [vmem:[%s805] sm:$0xff]
          %v807 = vld [vmem:[#allocation5] sm:$0x1]
          %v808 = vld [vmem:[#allocation6] sm:$0x1]
          %810 = vset.pattern.permute.xlu0 0
          %811 = vperm.xlu0 %810, %v808
          %v812 = vpop.permute.xlu0 %811
          %v814 = vlaneseq
          %v815 = vshrl.u32 %v814, 7
          %v816 = vsub.s32 0, %v815
          %v817 = vrot.slane %v812, %v816
          %vm818 = vcmask 523264
          %v820 = vsel %vm818, %v807, 0
          %v823 = vsel %vm818, %v806, 0
          %825 = vmatprep.subr.mxu0 0.0
          %826 = vmatpush1.xpose.msra.mxu0 0.0
          %827 = vmatprep.subr.mxu0 0.0
          %828 = vmatpush1.xpose.msra.mxu0 0.0
          %829 = vmatprep.subr.mxu0 0.0
          %830 = vmatpush1.xpose.msra.mxu0 0.0
          %831 = vmatprep.subr.mxu0 0.0
          %832 = vmatpush1.xpose.msra.mxu0 0.0
          %833 = vmatprep.subr.mxu0 0.0
          %834 = vmatpush1.xpose.msra.mxu0 0.0
          %835 = vmatprep.subr.mxu0 0.0
          %836 = vmatpush1.xpose.msra.mxu0 0.0
          %837 = vmatprep.subr.mxu0 0.0
          %838 = vmatpush1.xpose.msra.mxu0 0.0
          %839 = vmatprep.subr.mxu0 0.0
          %840 = vmatpush1.xpose.msra.mxu0 0.0
          %841 = vmatprep.subr.mxu0 0.0
          %842 = vmatpush1.xpose.msra.mxu0 0.0
          %843 = vmatprep.subr.mxu0 0.0
          %844 = vmatpush1.xpose.msra.mxu0 0.0
          %845 = vmatprep.subr.mxu0 0.0
          %846 = vmatpush1.xpose.msra.mxu0 0.0
          %847 = vmatprep.subr.mxu0 0.0
          %848 = vmatpush1.xpose.msra.mxu0 0.0
          %849 = vmatprep.subr.mxu0 0.0
          %850 = vmatpush1.xpose.msra.mxu0 0.0
          %851 = vmatprep.subr.mxu0 0.0
          %852 = vmatpush1.xpose.msra.mxu0 0.0
          %853 = vmatprep.subr.mxu0 0.0
          %854 = vmatpush1.xpose.msra.mxu0 0.0
          %855 = vmatprep.subr.mxu0 0.0
          %856 = vmatpush1.xpose.msra.mxu0 %v823
          %857 = vmatprep.subr.mxu0 0.0
          %858 = vmatpush2.xpose.msra.mxu0 0.0
          %859 = vmatprep.subr.mxu0 0.0
          %860 = vmatpush2.xpose.msra.mxu0 0.0
          %861 = vmatprep.subr.mxu0 0.0
          %862 = vmatpush2.xpose.msra.mxu0 0.0
          %863 = vmatprep.subr.mxu0 0.0
          %864 = vmatpush2.xpose.msra.mxu0 0.0
          %865 = vmatprep.subr.mxu0 0.0
          %866 = vmatpush2.xpose.msra.mxu0 0.0
          %867 = vmatprep.subr.mxu0 0.0
          %868 = vmatpush2.xpose.msra.mxu0 0.0
          %869 = vmatprep.subr.mxu0 0.0
          %870 = vmatpush2.xpose.msra.mxu0 0.0
          %871 = vmatprep.subr.mxu0 0.0
          %872 = vmatpush2.xpose.msra.mxu0 0.0
          %873 = vmatprep.subr.mxu0 0.0
          %874 = vmatpush2.xpose.msra.mxu0 0.0
          %875 = vmatprep.subr.mxu0 0.0
          %876 = vmatpush2.xpose.msra.mxu0 0.0
          %877 = vmatprep.subr.mxu0 0.0
          %878 = vmatpush2.xpose.msra.mxu0 0.0
          %879 = vmatprep.subr.mxu0 0.0
          %880 = vmatpush2.xpose.msra.mxu0 0.0
          %881 = vmatprep.subr.mxu0 0.0
          %882 = vmatpush2.xpose.msra.mxu0 0.0
          %883 = vmatprep.subr.mxu0 0.0
          %884 = vmatpush2.xpose.msra.mxu0 0.0
          %885 = vmatprep.subr.mxu0 0.0
          %886 = vmatpush2.xpose.msra.mxu0 0.0
          %887 = vmatprep.subr.mxu0 0.0
          %888 = vmatpush2.xpose.msra.mxu0 0.0
          %889 = vmatprep.mubr.f32.mxu0 0.0
          %890 = vmatmul.mubr.f32.gmra.mxu0 %v820
          %v891 = vpop.f32.mrf.mxu0
          %v892 = vadd.f32 %v817, %v891
          %v893 = vpop.f32.mrf.mxu0
          %894 = vdwg.mxu0
          %vm895 = vcmask 57344
          %896 = vst.msk [vmem:[%s479] sm:$0x1] %vm895, %v892
        $region96: #{tpu_custom_call.1} parent=59 // pred_fallthru
          _
        %s897 = sand.u32 %s283, 1
        %s898 = scalar_lea.sflag [#allocation10], %s897
        %s899 = sand.u32 %s283, 1
        %s900 = scalar_lea.vmem [#allocation17], %s899
        // Predicated region
        $region97: #{tpu_custom_call.1} parent=59 // pred_check
          %p901 = pneg %p293
        $region98: #{tpu_custom_call.1} parent=59 // pred_check_branch
          %903 = sbr.rel (%p901) target = $region100
        $region99: #{tpu_custom_call.1} parent=59 // pred_region
          %s904 = smul.u32 %s37, %s38
          %s906 = ssub.s32 16, 16
          %907 = vsyncadd %s898, %s906
          %s908 = smul.addr %s904, 16
          %s909 = scalar_lea.hbm %s10, %s908
          %s911 = sshll.u32 %s900, 4
          %s912 = int_to_ptr.vmem [resolvable:$true] %s911
          %914 = dma.vmem_to_hbm [thread:$0]  %s912, 16, %s909, %s898
        $region100: #{tpu_custom_call.1} parent=59 // pred_fallthru
          _
      $region60: #{tpu_custom_call.1} parent=5 // pred_fallthru
        _
      %p915 = scmp.le.s32.totalorder 2, %s28
      // Predicated region
      $region101: #{tpu_custom_call.1} parent=5 // pred_check
        %p916 = pneg %p915
      $region102: #{tpu_custom_call.1} parent=5 // pred_check_branch
        %918 = sbr.rel (%p916) target = $region104
      $region103: #{tpu_custom_call.1} parent=5 // pred_region
        %s919 = ssub.s32 %s28, 2
        // Predicated region
        $region105: #{tpu_custom_call.1} parent=103 // pred_check
          %p920 = pneg %p299
        $region106: #{tpu_custom_call.1} parent=103 // pred_check_branch
          %922 = sbr.rel (%p920) target = $region108
        $region107: #{tpu_custom_call.1} parent=103 // pred_region
          %s923 = sand.u32 %s284, 1
          %s924 = scalar_lea.sflag [#allocation10], %s923
          %s925 = sand.u32 %s284, 1
          %s926 = scalar_lea.vmem [#allocation17], %s925
          %927 = dma.done %s924, 16
        $region108: #{tpu_custom_call.1} parent=103 // pred_fallthru
          _
      $region104: #{tpu_custom_call.1} parent=5 // pred_fallthru
        _
    $region6: #{tpu_custom_call.1} parent=1 // loop_footer
      %s32 = sadd.s32 1, %s28
    $region7: #{tpu_custom_call.1} parent=1 // loop_footer_branch
      %27 = sbr.rel target = $region3
    $region8: #{tpu_custom_call.1} parent=1 // loop_exit
      _
    %928 = vsyncpa [#allocation9], 1
    %s929 = scalar_lea.sflag [#allocation9], 1
    %930 = vsyncpa %s929, 1
    %931 = vsyncpa [#allocation12], 1
    %s932 = scalar_lea.sflag [#allocation12], 1
    %933 = vsyncpa %s932, 1
    %934 = vsyncpa [#allocation15], 1
    %935 = vsyncpa [#allocation10], 1
    %s936 = scalar_lea.sflag [#allocation10], 1
    %937 = vsyncpa %s936, 1

</llo_original>
